<compile_context>
chip_gen: v5e
topology: v5e:2x2
jax: 0.10.0
libtpu: 0.0.40
codegen_flags: <defaults>
</compile_context>

<pallas_src>
import functools

import jax
import jax.numpy as jnp
from jax.experimental import pallas as pl
from jax.experimental.pallas import tpu as pltpu

# ----- module hyper-parameters (RegionLoss.__init__ defaults, synthetic cfg) ---
NUM_CLASSES = 3
NUM_ANCHORS = 2
ANCHORS = [1.0, 1.0, 3.0, 3.0]   # (aw, ah) per anchor, grid-cell units
COORD_SCALE = 1.0
NOOBJECT_SCALE = 1.0
OBJECT_SCALE = 5.0
CLASS_SCALE = 1.0
THRESH = 0.6
# TODO(synk): cfg.neg_ratio is treated as 'full' (neg_filter = identity) and
# cfg.metayolo as False; the reference code depends on an undefined `cfg`.

_PAD_LOGIT = -20.0                       # padded raw cells: sigmoid~0, exp~0
_VMEM_WINDOW_BUDGET = 20 * 1024 * 1024   # double-buffered windows, all gens
_VMEM_LIMIT = 32 * 1024 * 1024           # scoped VMEM (<= v7x 64 MiB physical)


def _round_up(x, m):
    return (x + m - 1) // m * m


def _pick_block_m(Mp, bytes_per_row, budget=_VMEM_WINDOW_BUDGET):
    """Largest divisor of Mp whose double-buffered windows fit the budget."""
    cap = max(1, budget // max(1, 2 * bytes_per_row))
    bm = 1
    for d in range(1, Mp + 1):
        if Mp % d == 0 and d <= cap:
            bm = d
    return bm


# ----------------------------- Pallas kernel 1 ---------------------------------
def _decode_kernel(gx_ref, gy_ref, aw_ref, ah_ref, out_ref, box_ref):
    """Decode predicted boxes for bm (batch,anchor) rows per grid step.

    gx_ref / gy_ref : VMEM (1, 1, Sp)      grid x / y coordinates (broadcast)
    aw_ref / ah_ref : VMEM (bm, 1, 1)      anchor w / h per row (broadcast)
    out_ref         : VMEM (bm, c_blk, Sp) raw network output (native dtype)
    box_ref         : VMEM (bm, 4, Sp)     decoded [px, py, pw, ph] slab
    """
    o = out_ref[...].astype(jnp.float32)
    box_ref[:, 0:1, :] = jax.nn.sigmoid(o[:, 0:1, :]) + gx_ref[...]
    box_ref[:, 1:2, :] = jax.nn.sigmoid(o[:, 1:2, :]) + gy_ref[...]
    box_ref[:, 2:3, :] = jnp.exp(o[:, 2:3, :]) * aw_ref[...]
    box_ref[:, 3:4, :] = jnp.exp(o[:, 3:4, :]) * ah_ref[...]


# ----------------------------- Pallas kernel 2 ---------------------------------
def _loss_kernel(out_ref, tgt_ref, part_ref, *, nC):
    """Per-step masked loss partial sums for bm rows.

    out_ref  : (bm, 5+nC, Sp) raw output (sigmoid recomputed here on the EUP)
    tgt_ref  : (bm, 8, Sp)    packed [tx,ty,tw,th,tconf,coord_mask,conf_mask,tcls]
    part_ref : (1, 8, 128)    per-step partials; sublane 0, lanes 0..7 hold
                              [lx, ly, lw, lh, lconf, lcls, total, nProposals]
    """
    o = out_ref[...].astype(jnp.float32)
    t = tgt_ref[...]

    x = jax.nn.sigmoid(o[:, 0:1, :])
    y = jax.nn.sigmoid(o[:, 1:2, :])
    w = o[:, 2:3, :]
    h = o[:, 3:4, :]
    conf = jax.nn.sigmoid(o[:, 4:5, :])
    logits = o[:, 5:5 + nC, :]                         # (bm, nC, Sp)

    tx = t[:, 0:1, :]
    ty = t[:, 1:2, :]
    tw = t[:, 2:3, :]
    th = t[:, 3:4, :]
    tconf = t[:, 4:5, :]
    cm = t[:, 5:6, :]                                  # coord_mask (== cls_mask)
    fm = t[:, 6:7, :]                                  # conf_mask (sqrt folded)
    tci = t[:, 7:8, :].astype(jnp.int32)               # target class index

    lx = COORD_SCALE * 0.5 * jnp.sum((x - tx) * (x - tx) * cm)
    ly = COORD_SCALE * 0.5 * jnp.sum((y - ty) * (y - ty) * cm)
    lw = COORD_SCALE * 0.5 * jnp.sum((w - tw) * (w - tw) * cm)
    lh = COORD_SCALE * 0.5 * jnp.sum((h - th) * (h - th) * cm)
    # reference: MSE(conf*sqrt(fm), tconf*sqrt(fm)) == sum((conf-tconf)^2 * fm)
    lconf = 0.5 * jnp.sum((conf - tconf) * (conf - tconf) * fm)

    # masked sum-reduced softmax cross-entropy; one-hot built in-kernel.
    mx = jnp.max(logits, axis=1, keepdims=True)
    lse = mx + jnp.log(jnp.sum(jnp.exp(logits - mx), axis=1, keepdims=True))
    onehot = (jax.lax.broadcasted_iota(jnp.int32, logits.shape, 1)
              == tci).astype(jnp.float32)
    picked = jnp.sum(onehot * logits, axis=1, keepdims=True)
    lcls = CLASS_SCALE * jnp.sum((lse - picked) * cm)

    nprop = jnp.sum((conf > 0.25).astype(jnp.float32))
    total = lx + ly + lw + lh + lconf + lcls

    sub = jax.lax.broadcasted_iota(jnp.int32, (1, 8, 128), 1)
    lane = jax.lax.broadcasted_iota(jnp.int32, (1, 8, 128), 2)
    acc = jnp.zeros((1, 8, 128), jnp.float32)
    for k, v in enumerate((lx, ly, lw, lh, lconf, lcls, total, nprop)):
        acc = acc + jnp.where((sub == 0) & (lane == k), v, 0.0)
    part_ref[...] = acc


# ----------------------------- JAX glue: build_targets -------------------------
def _iou_xywh(x1, y1, w1, h1, x2, y2, w2, h2):
    l1 = x1 - w1 * 0.5
    r1 = x1 + w1 * 0.5
    t1 = y1 - h1 * 0.5
    b1 = y1 + h1 * 0.5
    l2 = x2 - w2 * 0.5
    r2 = x2 + w2 * 0.5
    t2 = y2 - h2 * 0.5
    b2 = y2 + h2 * 0.5
    iw = jnp.maximum(jnp.minimum(r1, r2) - jnp.maximum(l1, l2), 0.0)
    ih = jnp.maximum(jnp.minimum(b1, b2) - jnp.maximum(t1, t2), 0.0)
    inter = iw * ih
    union = w1 * h1 + w2 * h2 - inter
    return inter / jnp.maximum(union, 1e-9)


def build_targets_jax(pbx, pby, pbw, pbh, target, anchors, nA, nH, nW,
                      noobject_scale, object_scale, thresh):
    # pbx..pbh: (nB, nA*nH*nW) pred-box components in grid units
    # target  : (nB, maxT, 5)  [cls, cx, cy, w, h] normalized to [0,1]
    nB, maxT, _ = target.shape
    NCELL = nA * nH * nW
    total = nB * NCELL

    valid = target[:, :, 3] > 0.0
    gx = target[:, :, 1] * nW
    gy = target[:, :, 2] * nH
    gw = target[:, :, 3] * nW
    gh = target[:, :, 4] * nH
    gi = jnp.clip(jnp.floor(gx).astype(jnp.int32), 0, nW - 1)
    gj = jnp.clip(jnp.floor(gy).astype(jnp.int32), 0, nH - 1)

    # best anchor per GT (shape-only IOU)
    aw = anchors[:, 0]
    ah = anchors[:, 1]
    inter = (jnp.minimum(gw[..., None], aw[None, None, :])
             * jnp.minimum(gh[..., None], ah[None, None, :]))
    union = gw[..., None] * gh[..., None] + (aw * ah)[None, None, :] - inter
    best_a = jnp.argmax(inter / jnp.maximum(union, 1e-9), axis=-1)

    # silence confident predictions that overlap any GT above the threshold
    ious = _iou_xywh(pbx[:, :, None], pby[:, :, None],
                     pbw[:, :, None], pbh[:, :, None],
                     gx[:, None, :], gy[:, None, :],
                     gw[:, None, :], gh[:, None, :])
    ious = jnp.where(valid[:, None, :], ious, 0.0)
    conf_mask_flat = jnp.where(jnp.max(ious, axis=-1) > thresh,
                               0.0, noobject_scale)           # (nB, NCELL)

    b_idx = jnp.broadcast_to(jnp.arange(nB)[:, None], (nB, maxT))
    cell = ((b_idx * nA + best_a) * nH + gj) * nW + gi
    cell = jnp.where(valid, cell, total)          # OOB -> dropped by scatter
    cell_f = cell.reshape(-1)

    # NOTE: duplicate GT cells have an unspecified scatter winner (the PyTorch
    # reference overwrites sequentially); acceptable for this port.
    def scatter(vals):
        return (jnp.zeros((total,), jnp.float32)
                .at[cell_f].set(vals.reshape(-1).astype(jnp.float32),
                                mode="drop")
                .reshape(nB, nA, nH, nW))

    ones = jnp.ones((nB, maxT), jnp.float32)
    coord_mask = scatter(ones)
    cls_mask = coord_mask
    conf_mask = (conf_mask_flat.reshape(-1)
                 .at[cell_f].set(object_scale, mode="drop")
                 .reshape(nB, nA, nH, nW))

    aw_b = anchors[best_a, 0]
    ah_b = anchors[best_a, 1]
    tx = scatter(gx - jnp.floor(gx))
    ty = scatter(gy - jnp.floor(gy))
    tw = scatter(jnp.log(jnp.maximum(gw, 1e-9) / aw_b))
    th = scatter(jnp.log(jnp.maximum(gh, 1e-9) / ah_b))
    tcls = scatter(target[:, :, 0])

    cidx = jnp.clip(cell_f, 0, total - 1)
    sel = lambda a: a.reshape(-1)[cidx]
    iou_gt = _iou_xywh(sel(pbx), sel(pby), sel(pbw), sel(pbh),
                       gx.reshape(-1), gy.reshape(-1),
                       gw.reshape(-1), gh.reshape(-1)).reshape(nB, maxT)
    tconf = scatter(iou_gt)

    nGT = jnp.sum(valid.astype(jnp.int32))
    nCorrect = jnp.sum(((iou_gt > 0.5) & valid).astype(jnp.int32))
    return (nGT, nCorrect, coord_mask, conf_mask, cls_mask,
            tx, ty, tw, th, tconf, tcls)


# ----------------------------- wrapper ------------------------------------------
def region_loss(output, target, anchors_list=ANCHORS,
                num_anchors=NUM_ANCHORS, num_classes=NUM_CLASSES):
    nA, nC = num_anchors, num_classes
    nB, _, nH, nW = output.shape
    S = nH * nW
    M = nB * nA
    C = 5 + nC
    if target.ndim == 2:
        target = target.reshape(nB, -1, 5)
    target = target.astype(jnp.float32)
    # TODO(synk): neg_filter's random negative-sampling branch (cfg.neg_ratio
    # numeric) is intentionally omitted; 'full' mode keeps all samples.

    Sp = _round_up(S, 128)                 # lane-dense blocks (multiple of 128)
    Mp = _round_up(M, 8)                   # flexible blocking on the lead dim

    # raw output stays in its native dtype (bf16 stays bf16); upcast in-kernel.
    out_r = output.reshape(M, C, S)                              # free reshape
    if (Sp != S) or (Mp != M):
        out_p = jnp.pad(out_r, ((0, Mp - M), (0, 0), (0, Sp - S)),
                        constant_values=_PAD_LOGIT)
    else:
        out_p = out_r
    osize = out_p.dtype.itemsize

    anchors = jnp.asarray(anchors_list, jnp.float32).reshape(nA, 2)
    aw_m = jnp.tile(anchors[:, 0], nB)
    ah_m = jnp.tile(anchors[:, 1], nB)
    if Mp != M:
        aw_m = jnp.pad(aw_m, (0, Mp - M), constant_values=1.0)
        ah_m = jnp.pad(ah_m, (0, Mp - M), constant_values=1.0)
    aw_m = aw_m.reshape(Mp, 1, 1)
    ah_m = ah_m.reshape(Mp, 1, 1)

    col = jnp.arange(Sp, dtype=jnp.int32)
    gx_row = (col % nW).astype(jnp.float32).reshape(1, 1, Sp)
    gy_row = (col // nW).astype(jnp.float32).reshape(1, 1, Sp)

    # VMEM-budgeted block size shared by both kernels (kernel 2 dominates).
    c_blk = 8 if C >= 8 else C             # decode only needs channels 0..3
    row1 = c_blk * Sp * osize + 4 * Sp * 4
    row2 = C * Sp * osize + 8 * Sp * 4
    bm = _pick_block_m(Mp, max(row1, row2))
    gm = Mp // bm

    cparams = pltpu.CompilerParams(dimension_semantics=("parallel",),
                                   vmem_limit_bytes=_VMEM_LIMIT)

    # ---- kernel 1: box decode -> one contiguous (Mp, 4, Sp) slab ------------------
    boxes_p = pl.pallas_call(
        _decode_kernel,
        out_shape=jax.ShapeDtypeStruct((Mp, 4, Sp), jnp.float32),
        grid=(gm,),
        in_specs=[
            pl.BlockSpec((1, 1, Sp), lambda i: (0, 0, 0)),       # grid_x
            pl.BlockSpec((1, 1, Sp), lambda i: (0, 0, 0)),       # grid_y
            pl.BlockSpec((bm, 1, 1), lambda i: (i, 0, 0)),       # anchor_w
            pl.BlockSpec((bm, 1, 1), lambda i: (i, 0, 0)),       # anchor_h
            pl.BlockSpec((bm, c_blk, Sp), lambda i: (i, 0, 0)),  # raw output
        ],
        out_specs=pl.BlockSpec((bm, 4, Sp), lambda i: (i, 0, 0)),
        compiler_params=cparams,
    )(gx_row, gy_row, aw_m, ah_m, out_p)

    # ---- plain-JAX glue: build targets --------------------------------------------
    boxes = boxes_p[:M, :, :S]                                   # drop padding
    NCELL = nA * nH * nW
    px = boxes[:, 0, :].reshape(nB, NCELL)
    py = boxes[:, 1, :].reshape(nB, NCELL)
    pw = boxes[:, 2, :].reshape(nB, NCELL)
    ph = boxes[:, 3, :].reshape(nB, NCELL)

    (nGT, nCorrect, coord_mask, conf_mask, cls_mask,
     tx, ty, tw, th, tconf, tcls) = build_targets_jax(
        px, py, pw, ph, target, anchors, nA, nH, nW,
        NOOBJECT_SCALE, OBJECT_SCALE, THRESH)

    # one packed target slab; cls_mask == coord_mask, so it is not re-read.
    tgt = jnp.stack([tx, ty, tw, th, tconf, coord_mask, conf_mask, tcls],
                    axis=2).reshape(M, 8, S).astype(jnp.float32)
    if (Sp != S) or (Mp != M):
        tgt = jnp.pad(tgt, ((0, Mp - M), (0, 0), (0, Sp - S)))   # masks -> 0

    # ---- kernel 2: per-step loss partials, "parallel" grid --------------------------
    partials = pl.pallas_call(
        functools.partial(_loss_kernel, nC=nC),
        out_shape=jax.ShapeDtypeStruct((gm, 8, 128), jnp.float32),
        grid=(gm,),
        in_specs=[
            pl.BlockSpec((bm, C, Sp), lambda i: (i, 0, 0)),      # raw output
            pl.BlockSpec((bm, 8, Sp), lambda i: (i, 0, 0)),      # packed targets
        ],
        out_specs=pl.BlockSpec((1, 8, 128), lambda i: (i, 0, 0)),
        compiler_params=cparams,
    )(out_p, tgt)

    losses = jnp.sum(partials, axis=(0, 1))                      # (128,)

    return {
        "loss": losses[6],
        "loss_x": losses[0], "loss_y": losses[1],
        "loss_w": losses[2], "loss_h": losses[3],
        "loss_conf": losses[4], "loss_cls": losses[5],
        "nProposals": losses[7], "nGT": nGT, "nCorrect": nCorrect,
    }


# ----------------------------- main ----------------------------------------------
if __name__ == "__main__":
    nB, nA, nC, nH, nW = 2, NUM_ANCHORS, NUM_CLASSES, 16, 16
    key = jax.random.PRNGKey(0)
    output = 0.5 * jax.random.normal(key, (nB, nA * (5 + nC), nH, nW),
                                     dtype=jnp.float32)

    target = jnp.zeros((nB, 50, 5), jnp.float32)
    target = target.at[0, 0].set(jnp.array([1.0, 0.30, 0.40, 0.20, 0.25]))
    target = target.at[0, 1].set(jnp.array([2.0, 0.70, 0.60, 0.10, 0.15]))
    target = target.at[1, 0].set(jnp.array([0.0, 0.50, 0.55, 0.35, 0.30]))

    res = region_loss(output, target)
    jax.block_until_ready(res)
    assert jnp.isfinite(res["loss"])
    print("KERNEL_OK")
</pallas_src>

<mosaic_0001>
module attributes {stable_mosaic.version = 11 : i64} {
  func.func @_decode_kernel(%arg0: i32, %arg1: memref<1x1x256xf32, #tpu.memory_space<vmem>>, %arg2: memref<1x1x256xf32, #tpu.memory_space<vmem>>, %arg3: memref<8x1x1xf32, #tpu.memory_space<vmem>>, %arg4: memref<8x1x1xf32, #tpu.memory_space<vmem>>, %arg5: memref<8x8x256xf32, #tpu.memory_space<vmem>>, %arg6: memref<8x4x256xf32, #tpu.memory_space<vmem>>) attributes {dimension_semantics = [#tpu.dimension_semantics<parallel>], iteration_bounds = array<i64: 1>, scalar_prefetch = 0 : i64, scratch_operands = 0 : i64, tpu.core_type = #tpu.core_type<tc>, window_params = [{pipeline_mode = #tpu.pipeline_mode<synchronous>, transform_indices = @transform_0, window_bounds = array<i64: 1, 1, 256>}, {pipeline_mode = #tpu.pipeline_mode<synchronous>, transform_indices = @transform_1, window_bounds = array<i64: 1, 1, 256>}, {transform_indices = @transform_2, window_bounds = array<i64: 8, 1, 1>}, {transform_indices = @transform_3, window_bounds = array<i64: 8, 1, 1>}, {transform_indices = @transform_4, window_bounds = array<i64: 8, 8, 256>}, {transform_indices = @transform_5, window_bounds = array<i64: 8, 4, 256>}]} {
    %c0 = arith.constant 0 : index
    %c0_0 = arith.constant 0 : index
    %c0_1 = arith.constant 0 : index
    %0 = vector.load %arg5[%c0, %c0_0, %c0_1] : memref<8x8x256xf32, #tpu.memory_space<vmem>>, vector<8x8x256xf32>
    %1 = vector.extract_strided_slice %0 {offsets = [0, 0, 0], sizes = [8, 1, 256], strides = [1, 1, 1]} : vector<8x8x256xf32> to vector<8x1x256xf32>
    %2 = arith.negf %1 : vector<8x1x256xf32>
    %3 = math.exp %2 : vector<8x1x256xf32>
    %cst = arith.constant 1.000000e+00 : f32
    %4 = vector.broadcast %cst : f32 to vector<8x1x256xf32>
    %5 = arith.addf %4, %3 : vector<8x1x256xf32>
    %6 = arith.divf %4, %5 : vector<8x1x256xf32>
    %c0_2 = arith.constant 0 : index
    %c0_3 = arith.constant 0 : index
    %c0_4 = arith.constant 0 : index
    %7 = vector.load %arg1[%c0_2, %c0_3, %c0_4] : memref<1x1x256xf32, #tpu.memory_space<vmem>>, vector<1x1x256xf32>
    %8 = vector.broadcast %7 : vector<1x1x256xf32> to vector<8x1x256xf32>
    %9 = arith.addf %6, %8 : vector<8x1x256xf32>
    %c0_5 = arith.constant 0 : index
    %c0_6 = arith.constant 0 : index
    %c0_7 = arith.constant 0 : index
    %10 = vector.load %arg6[%c0_5, %c0_6, %c0_7] : memref<8x4x256xf32, #tpu.memory_space<vmem>>, vector<8x1x256xf32>
    tpu.vector_store %arg6[%c0_5, %c0_6, %c0_7], %9 {strides = array<i32>} : memref<8x4x256xf32, #tpu.memory_space<vmem>>, vector<8x1x256xf32>,
    %11 = vector.extract_strided_slice %0 {offsets = [0, 1, 0], sizes = [8, 1, 256], strides = [1, 1, 1]} : vector<8x8x256xf32> to vector<8x1x256xf32>
    %12 = arith.negf %11 : vector<8x1x256xf32>
    %13 = math.exp %12 : vector<8x1x256xf32>
    %cst_8 = arith.constant 1.000000e+00 : f32
    %14 = vector.broadcast %cst_8 : f32 to vector<8x1x256xf32>
    %15 = arith.addf %14, %13 : vector<8x1x256xf32>
    %16 = arith.divf %14, %15 : vector<8x1x256xf32>
    %c0_9 = arith.constant 0 : index
    %c0_10 = arith.constant 0 : index
    %c0_11 = arith.constant 0 : index
    %17 = vector.load %arg2[%c0_9, %c0_10, %c0_11] : memref<1x1x256xf32, #tpu.memory_space<vmem>>, vector<1x1x256xf32>
    %18 = vector.broadcast %17 : vector<1x1x256xf32> to vector<8x1x256xf32>
    %19 = arith.addf %16, %18 : vector<8x1x256xf32>
    %c0_12 = arith.constant 0 : index
    %c1 = arith.constant 1 : index
    %c0_13 = arith.constant 0 : index
    %20 = vector.load %arg6[%c0_12, %c1, %c0_13] : memref<8x4x256xf32, #tpu.memory_space<vmem>>, vector<8x1x256xf32>
    tpu.vector_store %arg6[%c0_12, %c1, %c0_13], %19 {strides = array<i32>} : memref<8x4x256xf32, #tpu.memory_space<vmem>>, vector<8x1x256xf32>,
    %21 = vector.extract_strided_slice %0 {offsets = [0, 2, 0], sizes = [8, 1, 256], strides = [1, 1, 1]} : vector<8x8x256xf32> to vector<8x1x256xf32>
    %22 = math.exp %21 : vector<8x1x256xf32>
    %c0_14 = arith.constant 0 : index
    %c0_15 = arith.constant 0 : index
    %c0_16 = arith.constant 0 : index
    %23 = vector.load %arg3[%c0_14, %c0_15, %c0_16] : memref<8x1x1xf32, #tpu.memory_space<vmem>>, vector<8x1x1xf32>
    %24 = vector.broadcast %23 : vector<8x1x1xf32> to vector<8x1x256xf32>
    %25 = arith.mulf %22, %24 : vector<8x1x256xf32>
    %c0_17 = arith.constant 0 : index
    %c2 = arith.constant 2 : index
    %c0_18 = arith.constant 0 : index
    %26 = vector.load %arg6[%c0_17, %c2, %c0_18] : memref<8x4x256xf32, #tpu.memory_space<vmem>>, vector<8x1x256xf32>
    tpu.vector_store %arg6[%c0_17, %c2, %c0_18], %25 {strides = array<i32>} : memref<8x4x256xf32, #tpu.memory_space<vmem>>, vector<8x1x256xf32>,
    %27 = vector.extract_strided_slice %0 {offsets = [0, 3, 0], sizes = [8, 1, 256], strides = [1, 1, 1]} : vector<8x8x256xf32> to vector<8x1x256xf32>
    %28 = math.exp %27 : vector<8x1x256xf32>
    %c0_19 = arith.constant 0 : index
    %c0_20 = arith.constant 0 : index
    %c0_21 = arith.constant 0 : index
    %29 = vector.load %arg4[%c0_19, %c0_20, %c0_21] : memref<8x1x1xf32, #tpu.memory_space<vmem>>, vector<8x1x1xf32>
    %30 = vector.broadcast %29 : vector<8x1x1xf32> to vector<8x1x256xf32>
    %31 = arith.mulf %28, %30 : vector<8x1x256xf32>
    %c0_22 = arith.constant 0 : index
    %c3 = arith.constant 3 : index
    %c0_23 = arith.constant 0 : index
    %32 = vector.load %arg6[%c0_22, %c3, %c0_23] : memref<8x4x256xf32, #tpu.memory_space<vmem>>, vector<8x1x256xf32>
    tpu.vector_store %arg6[%c0_22, %c3, %c0_23], %31 {strides = array<i32>} : memref<8x4x256xf32, #tpu.memory_space<vmem>>, vector<8x1x256xf32>,
    return
  }
  func.func @transform_0(%arg0: i32) -> (i32, i32, i32) {
    %c0_i32 = arith.constant 0 : i32
    %c0_i32_0 = arith.constant 0 : i32
    %c0_i32_1 = arith.constant 0 : i32
    %c0_i32_2 = arith.constant 0 : i32
    return %c0_i32, %c0_i32_0, %c0_i32_1 : i32, i32, i32
  }
  func.func @transform_1(%arg0: i32) -> (i32, i32, i32) {
    %c0_i32 = arith.constant 0 : i32
    %c0_i32_0 = arith.constant 0 : i32
    %c0_i32_1 = arith.constant 0 : i32
    %c0_i32_2 = arith.constant 0 : i32
    return %c0_i32, %c0_i32_0, %c0_i32_1 : i32, i32, i32
  }
  func.func @transform_2(%arg0: i32) -> (i32, i32, i32) {
    %c0_i32 = arith.constant 0 : i32
    %c0_i32_0 = arith.constant 0 : i32
    %c0_i32_1 = arith.constant 0 : i32
    return %arg0, %c0_i32, %c0_i32_0 : i32, i32, i32
  }
  func.func @transform_3(%arg0: i32) -> (i32, i32, i32) {
    %c0_i32 = arith.constant 0 : i32
    %c0_i32_0 = arith.constant 0 : i32
    %c0_i32_1 = arith.constant 0 : i32
    return %arg0, %c0_i32, %c0_i32_0 : i32, i32, i32
  }
  func.func @transform_4(%arg0: i32) -> (i32, i32, i32) {
    %c0_i32 = arith.constant 0 : i32
    %c0_i32_0 = arith.constant 0 : i32
    %c0_i32_1 = arith.constant 0 : i32
    return %arg0, %c0_i32, %c0_i32_0 : i32, i32, i32
  }
  func.func @transform_5(%arg0: i32) -> (i32, i32, i32) {
    %c0_i32 = arith.constant 0 : i32
    %c0_i32_0 = arith.constant 0 : i32
    %c0_i32_1 = arith.constant 0 : i32
    return %arg0, %c0_i32, %c0_i32_0 : i32, i32, i32
  }
}

</mosaic_0001>

<llo_original>
// kernel: tpu_custom_call.1
$region0: #{tpu_custom_call.1}
  #allocation0 [shape = 'u32[]', space=smem, size = 0x4, offset = 0x4, fixed_abs, tag = 'smem constant byte address 0x4 - core index']
  #allocation1 [shape = 'u32[72,128]{1,0:T(1,128)}', space=vmem, size = 0x9000, scoped, tag = 'internal scratch']
  %s0 = inlined_call_operand.vmem [shape: f32[1,1,256], index: 0, kind: input, shape index: {}]
  %s1 = inlined_call_operand.vmem [shape: f32[1,1,256], index: 1, kind: input, shape index: {}]
  %s2 = inlined_call_operand.vmem [shape: f32[8,1,1], index: 2, kind: input, shape index: {}]
  %s3 = inlined_call_operand.vmem [shape: f32[8,1,1], index: 3, kind: input, shape index: {}]
  %s4 = inlined_call_operand.hbm [shape: f32[8,8,256], index: 4, kind: input, shape index: {}]
  %s5 = inlined_call_operand.hbm [shape: f32[8,4,256], index: 5, kind: output, shape index: {}]
  %s6 = sld [smem:[#allocation0]]
  $region34: #{tpu_custom_call.1} parent=0
    _
  %s8 = ssub.s32 1, %s6
  %s9 = scalar_select 0, %s8, %s6
  $region1: #{tpu_custom_call.1} parent=0
    #allocation2 [shape = 'u8[65536]{0}', space=vmem, size = 0x10000, scoped, tag = 'input window, operand 4, single buffered']
    #allocation3 [shape = 's32[1]{0}', space=sflag, size = 0x4, scoped, tag = 'scoped memory for tpu_custom_call.1']
    #allocation4 [shape = 's32[1]{0}', space=sflag, size = 0x4, scoped, tag = 'scoped memory for tpu_custom_call.1']
    #allocation5 [shape = 'u8[32768]{0}', space=vmem, size = 0x8000, scoped, tag = 'output window, operand 0, single buffered']
    %10 = vsyncpa [#allocation3], 0
    %11 = vsyncpa [#allocation4], 0
    // Predicated region
    $region2: #{tpu_custom_call.1} parent=1 // pred_check
      _
    $region3: #{tpu_custom_call.1} parent=1 // pred_check_branch
      %13 = sbr.rel (0) target = $region5
    $region4: #{tpu_custom_call.1} parent=1 // pred_region
      _
    $region5: #{tpu_custom_call.1} parent=1 // pred_fallthru
      _
    // Predicated region
    $region6: #{tpu_custom_call.1} parent=1 // pred_check
      _
    $region7: #{tpu_custom_call.1} parent=1 // pred_check_branch
      %15 = sbr.rel (0) target = $region9
    $region8: #{tpu_custom_call.1} parent=1 // pred_region
      _
    $region9: #{tpu_custom_call.1} parent=1 // pred_fallthru
      _
    // Predicated region
    $region10: #{tpu_custom_call.1} parent=1 // pred_check
      _
    $region11: #{tpu_custom_call.1} parent=1 // pred_check_branch
      %17 = sbr.rel (0) target = $region13
    $region12: #{tpu_custom_call.1} parent=1 // pred_region
      _
    $region13: #{tpu_custom_call.1} parent=1 // pred_fallthru
      _
    // Predicated region
    $region14: #{tpu_custom_call.1} parent=1 // pred_check
      _
    $region15: #{tpu_custom_call.1} parent=1 // pred_check_branch
      %19 = sbr.rel (0) target = $region17
    $region16: #{tpu_custom_call.1} parent=1 // pred_region
      _
    $region17: #{tpu_custom_call.1} parent=1 // pred_fallthru
      _
    // Predicated region
    $region18: #{tpu_custom_call.1} parent=1 // pred_check
      _
    $region19: #{tpu_custom_call.1} parent=1 // pred_check_branch
      %21 = sbr.rel (0) target = $region21
    $region20: #{tpu_custom_call.1} parent=1 // pred_region
      %23 = vsyncadd [#allocation3], 0
      %s24 = sshll.u32 %s4, 4
      %s25 = int_to_ptr.hbm [resolvable:$true] %s24
      %s26 = sshll.u32 [#allocation2], 4
      %s27 = int_to_ptr.vmem [resolvable:$true] %s26
      %32 = dma.hbm_to_vmem [thread:$0]  %s25, 2048, %s27, [#allocation3], 256, 256, 16
    $region21: #{tpu_custom_call.1} parent=1 // pred_fallthru
      _
    // Predicated region
    $region22: #{tpu_custom_call.1} parent=1 // pred_check
      _
    $region23: #{tpu_custom_call.1} parent=1 // pred_check_branch
      %34 = sbr.rel (0) target = $region25
    $region24: #{tpu_custom_call.1} parent=1 // pred_region
      %36 = dma.done [#allocation3], 2048
    $region25: #{tpu_custom_call.1} parent=1 // pred_fallthru
      _
    %v37 = vld [vmem:[#allocation2] sm:$0xff]
    %v38 = vld [vmem:[#allocation2 + $0x8] sm:$0xff]
    %v39 = vld [vmem:[#allocation2 + $0x10] sm:$0xff]
    %v40 = vld [vmem:[#allocation2 + $0x18] sm:$0xff]
    %v41 = vld [vmem:[#allocation2 + $0x20] sm:$0xff]
    %v42 = vld [vmem:[#allocation2 + $0x28] sm:$0xff]
    %v43 = vld [vmem:[#allocation2 + $0x30] sm:$0xff]
    %v44 = vld [vmem:[#allocation2 + $0x38] sm:$0xff]
    %v45 = vld [vmem:[#allocation2 + $0x40] sm:$0xff]
    %v46 = vld [vmem:[#allocation2 + $0x48] sm:$0xff]
    %v47 = vld [vmem:[#allocation2 + $0x50] sm:$0xff]
    %v48 = vld [vmem:[#allocation2 + $0x58] sm:$0xff]
    %v49 = vld [vmem:[#allocation2 + $0x60] sm:$0xff]
    %v50 = vld [vmem:[#allocation2 + $0x68] sm:$0xff]
    %v51 = vld [vmem:[#allocation2 + $0x70] sm:$0xff]
    %v52 = vld [vmem:[#allocation2 + $0x78] sm:$0xff]
    %v53 = vxor.u32 %v37, 2147483648
    %v54 = vxor.u32 %v38, 2147483648
    %v55 = vxor.u32 %v39, 2147483648
    %v56 = vxor.u32 %v40, 2147483648
    %v57 = vxor.u32 %v41, 2147483648
    %v58 = vxor.u32 %v42, 2147483648
    %v59 = vxor.u32 %v43, 2147483648
    %v60 = vxor.u32 %v44, 2147483648
    %v61 = vxor.u32 %v45, 2147483648
    %v62 = vxor.u32 %v46, 2147483648
    %v63 = vxor.u32 %v47, 2147483648
    %v64 = vxor.u32 %v48, 2147483648
    %v65 = vxor.u32 %v49, 2147483648
    %v66 = vxor.u32 %v50, 2147483648
    %v67 = vxor.u32 %v51, 2147483648
    %v68 = vxor.u32 %v52, 2147483648
    %v69 = vmul.f32 %v53, 1.442695
    %v70 = vpow.pop %v69
    %v71 = vmul.f32 %v54, 1.442695
    %v72 = vpow.pop %v71
    %v73 = vmul.f32 %v55, 1.442695
    %v74 = vpow.pop %v73
    %v75 = vmul.f32 %v56, 1.442695
    %v76 = vpow.pop %v75
    %v77 = vmul.f32 %v57, 1.442695
    %v78 = vpow.pop %v77
    %v79 = vmul.f32 %v58, 1.442695
    %v80 = vpow.pop %v79
    %v81 = vmul.f32 %v59, 1.442695
    %v82 = vpow.pop %v81
    %v83 = vmul.f32 %v60, 1.442695
    %v84 = vpow.pop %v83
    %v85 = vmul.f32 %v61, 1.442695
    %v86 = vpow.pop %v85
    %v87 = vmul.f32 %v62, 1.442695
    %v88 = vpow.pop %v87
    %v89 = vmul.f32 %v63, 1.442695
    %v90 = vpow.pop %v89
    %v91 = vmul.f32 %v64, 1.442695
    %v92 = vpow.pop %v91
    %v93 = vmul.f32 %v65, 1.442695
    %v94 = vpow.pop %v93
    %v95 = vmul.f32 %v66, 1.442695
    %v96 = vpow.pop %v95
    %v97 = vmul.f32 %v67, 1.442695
    %v98 = vpow.pop %v97
    %v99 = vmul.f32 %v68, 1.442695
    %v100 = vpow.pop %v99
    %v101 = vadd.f32 %v70, 1.0
    %v102 = vadd.f32 %v72, 1.0
    %v103 = vadd.f32 %v74, 1.0
    %v104 = vadd.f32 %v76, 1.0
    %v105 = vadd.f32 %v78, 1.0
    %v106 = vadd.f32 %v80, 1.0
    %v107 = vadd.f32 %v82, 1.0
    %v108 = vadd.f32 %v84, 1.0
    %v109 = vadd.f32 %v86, 1.0
    %v110 = vadd.f32 %v88, 1.0
    %v111 = vadd.f32 %v90, 1.0
    %v112 = vadd.f32 %v92, 1.0
    %v113 = vadd.f32 %v94, 1.0
    %v114 = vadd.f32 %v96, 1.0
    %v115 = vadd.f32 %v98, 1.0
    %v116 = vadd.f32 %v100, 1.0
    %v117 = vrcp.pop %v101
    %v118 = vmul.f32 %v101, %v117
    %v119 = vsub.f32 1.0, %v118
    %v120 = vmul.f32 %v117, %v119
    %v121 = vadd.f32 %v117, %v120
    %vm122 = vweird.f32 %v101
    %vm123 = vweird.f32 %v117
    %vm124 = vmor %vm122, %vm123
    %v125 = vsel %vm124, %v117, %v121
    %v126 = vand.u32 2147483647, %v101
    %vm127 = vcmp.eq.f32.partialorder %v126, 8.507059e+37
    %v128 = vand.u32 %v101, 2147483648
    %v129 = vor.u32 1.1754944e-38, %v128
    %v130 = vsel %vm127, %v129, %v125
    %v131 = vmul.f32 1.0, %v130
    %v132 = vrcp.pop %v102
    %v133 = vmul.f32 %v102, %v132
    %v134 = vsub.f32 1.0, %v133
    %v135 = vmul.f32 %v132, %v134
    %v136 = vadd.f32 %v132, %v135
    %vm137 = vweird.f32 %v102
    %vm138 = vweird.f32 %v132
    %vm139 = vmor %vm137, %vm138
    %v140 = vsel %vm139, %v132, %v136
    %v141 = vand.u32 2147483647, %v102
    %vm142 = vcmp.eq.f32.partialorder %v141, 8.507059e+37
    %v143 = vand.u32 %v102, 2147483648
    %v144 = vor.u32 1.1754944e-38, %v143
    %v145 = vsel %vm142, %v144, %v140
    %v146 = vmul.f32 1.0, %v145
    %v147 = vrcp.pop %v103
    %v148 = vmul.f32 %v103, %v147
    %v149 = vsub.f32 1.0, %v148
    %v150 = vmul.f32 %v147, %v149
    %v151 = vadd.f32 %v147, %v150
    %vm152 = vweird.f32 %v103
    %vm153 = vweird.f32 %v147
    %vm154 = vmor %vm152, %vm153
    %v155 = vsel %vm154, %v147, %v151
    %v156 = vand.u32 2147483647, %v103
    %vm157 = vcmp.eq.f32.partialorder %v156, 8.507059e+37
    %v158 = vand.u32 %v103, 2147483648
    %v159 = vor.u32 1.1754944e-38, %v158
    %v160 = vsel %vm157, %v159, %v155
    %v161 = vmul.f32 1.0, %v160
    %v162 = vrcp.pop %v104
    %v163 = vmul.f32 %v104, %v162
    %v164 = vsub.f32 1.0, %v163
    %v165 = vmul.f32 %v162, %v164
    %v166 = vadd.f32 %v162, %v165
    %vm167 = vweird.f32 %v104
    %vm168 = vweird.f32 %v162
    %vm169 = vmor %vm167, %vm168
    %v170 = vsel %vm169, %v162, %v166
    %v171 = vand.u32 2147483647, %v104
    %vm172 = vcmp.eq.f32.partialorder %v171, 8.507059e+37
    %v173 = vand.u32 %v104, 2147483648
    %v174 = vor.u32 1.1754944e-38, %v173
    %v175 = vsel %vm172, %v174, %v170
    %v176 = vmul.f32 1.0, %v175
    %v177 = vrcp.pop %v105
    %v178 = vmul.f32 %v105, %v177
    %v179 = vsub.f32 1.0, %v178
    %v180 = vmul.f32 %v177, %v179
    %v181 = vadd.f32 %v177, %v180
    %vm182 = vweird.f32 %v105
    %vm183 = vweird.f32 %v177
    %vm184 = vmor %vm182, %vm183
    %v185 = vsel %vm184, %v177, %v181
    %v186 = vand.u32 2147483647, %v105
    %vm187 = vcmp.eq.f32.partialorder %v186, 8.507059e+37
    %v188 = vand.u32 %v105, 2147483648
    %v189 = vor.u32 1.1754944e-38, %v188
    %v190 = vsel %vm187, %v189, %v185
    %v191 = vmul.f32 1.0, %v190
    %v192 = vrcp.pop %v106
    %v193 = vmul.f32 %v106, %v192
    %v194 = vsub.f32 1.0, %v193
    %v195 = vmul.f32 %v192, %v194
    %v196 = vadd.f32 %v192, %v195
    %vm197 = vweird.f32 %v106
    %vm198 = vweird.f32 %v192
    %vm199 = vmor %vm197, %vm198
    %v200 = vsel %vm199, %v192, %v196
    %v201 = vand.u32 2147483647, %v106
    %vm202 = vcmp.eq.f32.partialorder %v201, 8.507059e+37
    %v203 = vand.u32 %v106, 2147483648
    %v204 = vor.u32 1.1754944e-38, %v203
    %v205 = vsel %vm202, %v204, %v200
    %v206 = vmul.f32 1.0, %v205
    %v207 = vrcp.pop %v107
    %v208 = vmul.f32 %v107, %v207
    %v209 = vsub.f32 1.0, %v208
    %v210 = vmul.f32 %v207, %v209
    %v211 = vadd.f32 %v207, %v210
    %vm212 = vweird.f32 %v107
    %vm213 = vweird.f32 %v207
    %vm214 = vmor %vm212, %vm213
    %v215 = vsel %vm214, %v207, %v211
    %v216 = vand.u32 2147483647, %v107
    %vm217 = vcmp.eq.f32.partialorder %v216, 8.507059e+37
    %v218 = vand.u32 %v107, 2147483648
    %v219 = vor.u32 1.1754944e-38, %v218
    %v220 = vsel %vm217, %v219, %v215
    %v221 = vmul.f32 1.0, %v220
    %v222 = vrcp.pop %v108
    %v223 = vmul.f32 %v108, %v222
    %v224 = vsub.f32 1.0, %v223
    %v225 = vmul.f32 %v222, %v224
    %v226 = vadd.f32 %v222, %v225
    %vm227 = vweird.f32 %v108
    %vm228 = vweird.f32 %v222
    %vm229 = vmor %vm227, %vm228
    %v230 = vsel %vm229, %v222, %v226
    %v231 = vand.u32 2147483647, %v108
    %vm232 = vcmp.eq.f32.partialorder %v231, 8.507059e+37
    %v233 = vand.u32 %v108, 2147483648
    %v234 = vor.u32 1.1754944e-38, %v233
    %v235 = vsel %vm232, %v234, %v230
    %v236 = vmul.f32 1.0, %v235
    %v237 = vrcp.pop %v109
    %v238 = vmul.f32 %v109, %v237
    %v239 = vsub.f32 1.0, %v238
    %v240 = vmul.f32 %v237, %v239
    %v241 = vadd.f32 %v237, %v240
    %vm242 = vweird.f32 %v109
    %vm243 = vweird.f32 %v237
    %vm244 = vmor %vm242, %vm243
    %v245 = vsel %vm244, %v237, %v241
    %v246 = vand.u32 2147483647, %v109
    %vm247 = vcmp.eq.f32.partialorder %v246, 8.507059e+37
    %v248 = vand.u32 %v109, 2147483648
    %v249 = vor.u32 1.1754944e-38, %v248
    %v250 = vsel %vm247, %v249, %v245
    %v251 = vmul.f32 1.0, %v250
    %v252 = vrcp.pop %v110
    %v253 = vmul.f32 %v110, %v252
    %v254 = vsub.f32 1.0, %v253
    %v255 = vmul.f32 %v252, %v254
    %v256 = vadd.f32 %v252, %v255
    %vm257 = vweird.f32 %v110
    %vm258 = vweird.f32 %v252
    %vm259 = vmor %vm257, %vm258
    %v260 = vsel %vm259, %v252, %v256
    %v261 = vand.u32 2147483647, %v110
    %vm262 = vcmp.eq.f32.partialorder %v261, 8.507059e+37
    %v263 = vand.u32 %v110, 2147483648
    %v264 = vor.u32 1.1754944e-38, %v263
    %v265 = vsel %vm262, %v264, %v260
    %v266 = vmul.f32 1.0, %v265
    %v267 = vrcp.pop %v111
    %v268 = vmul.f32 %v111, %v267
    %v269 = vsub.f32 1.0, %v268
    %v270 = vmul.f32 %v267, %v269
    %v271 = vadd.f32 %v267, %v270
    %vm272 = vweird.f32 %v111
    %vm273 = vweird.f32 %v267
    %vm274 = vmor %vm272, %vm273
    %v275 = vsel %vm274, %v267, %v271
    %v276 = vand.u32 2147483647, %v111
    %vm277 = vcmp.eq.f32.partialorder %v276, 8.507059e+37
    %v278 = vand.u32 %v111, 2147483648
    %v279 = vor.u32 1.1754944e-38, %v278
    %v280 = vsel %vm277, %v279, %v275
    %v281 = vmul.f32 1.0, %v280
    %v282 = vrcp.pop %v112
    %v283 = vmul.f32 %v112, %v282
    %v284 = vsub.f32 1.0, %v283
    %v285 = vmul.f32 %v282, %v284
    %v286 = vadd.f32 %v282, %v285
    %vm287 = vweird.f32 %v112
    %vm288 = vweird.f32 %v282
    %vm289 = vmor %vm287, %vm288
    %v290 = vsel %vm289, %v282, %v286
    %v291 = vand.u32 2147483647, %v112
    %vm292 = vcmp.eq.f32.partialorder %v291, 8.507059e+37
    %v293 = vand.u32 %v112, 2147483648
    %v294 = vor.u32 1.1754944e-38, %v293
    %v295 = vsel %vm292, %v294, %v290
    %v296 = vmul.f32 1.0, %v295
    %v297 = vrcp.pop %v113
    %v298 = vmul.f32 %v113, %v297
    %v299 = vsub.f32 1.0, %v298
    %v300 = vmul.f32 %v297, %v299
    %v301 = vadd.f32 %v297, %v300
    %vm302 = vweird.f32 %v113
    %vm303 = vweird.f32 %v297
    %vm304 = vmor %vm302, %vm303
    %v305 = vsel %vm304, %v297, %v301
    %v306 = vand.u32 2147483647, %v113
    %vm307 = vcmp.eq.f32.partialorder %v306, 8.507059e+37
    %v308 = vand.u32 %v113, 2147483648
    %v309 = vor.u32 1.1754944e-38, %v308
    %v310 = vsel %vm307, %v309, %v305
    %v311 = vmul.f32 1.0, %v310
    %v312 = vrcp.pop %v114
    %v313 = vmul.f32 %v114, %v312
    %v314 = vsub.f32 1.0, %v313
    %v315 = vmul.f32 %v312, %v314
    %v316 = vadd.f32 %v312, %v315
    %vm317 = vweird.f32 %v114
    %vm318 = vweird.f32 %v312
    %vm319 = vmor %vm317, %vm318
    %v320 = vsel %vm319, %v312, %v316
    %v321 = vand.u32 2147483647, %v114
    %vm322 = vcmp.eq.f32.partialorder %v321, 8.507059e+37
    %v323 = vand.u32 %v114, 2147483648
    %v324 = vor.u32 1.1754944e-38, %v323
    %v325 = vsel %vm322, %v324, %v320
    %v326 = vmul.f32 1.0, %v325
    %v327 = vrcp.pop %v115
    %v328 = vmul.f32 %v115, %v327
    %v329 = vsub.f32 1.0, %v328
    %v330 = vmul.f32 %v327, %v329
    %v331 = vadd.f32 %v327, %v330
    %vm332 = vweird.f32 %v115
    %vm333 = vweird.f32 %v327
    %vm334 = vmor %vm332, %vm333
    %v335 = vsel %vm334, %v327, %v331
    %v336 = vand.u32 2147483647, %v115
    %vm337 = vcmp.eq.f32.partialorder %v336, 8.507059e+37
    %v338 = vand.u32 %v115, 2147483648
    %v339 = vor.u32 1.1754944e-38, %v338
    %v340 = vsel %vm337, %v339, %v335
    %v341 = vmul.f32 1.0, %v340
    %v342 = vrcp.pop %v116
    %v343 = vmul.f32 %v116, %v342
    %v344 = vsub.f32 1.0, %v343
    %v345 = vmul.f32 %v342, %v344
    %v346 = vadd.f32 %v342, %v345
    %vm347 = vweird.f32 %v116
    %vm348 = vweird.f32 %v342
    %vm349 = vmor %vm347, %vm348
    %v350 = vsel %vm349, %v342, %v346
    %v351 = vand.u32 2147483647, %v116
    %vm352 = vcmp.eq.f32.partialorder %v351, 8.507059e+37
    %v353 = vand.u32 %v116, 2147483648
    %v354 = vor.u32 1.1754944e-38, %v353
    %v355 = vsel %vm352, %v354, %v350
    %v356 = vmul.f32 1.0, %v355
    %v357 = vld [vmem:[%s0] sm:$0x3]
    %v359 = vperm.slane %v357, 0
    %v360 = vperm.slane %v357, 1
    %v363 = vadd.f32 %v131, %v359
    %v364 = vadd.f32 %v146, %v360
    %v365 = vadd.f32 %v161, %v359
    %v366 = vadd.f32 %v176, %v360
    %v367 = vadd.f32 %v191, %v359
    %v368 = vadd.f32 %v206, %v360
    %v369 = vadd.f32 %v221, %v359
    %v370 = vadd.f32 %v236, %v360
    %v371 = vadd.f32 %v251, %v359
    %v372 = vadd.f32 %v266, %v360
    %v373 = vadd.f32 %v281, %v359
    %v374 = vadd.f32 %v296, %v360
    %v375 = vadd.f32 %v311, %v359
    %v376 = vadd.f32 %v326, %v360
    %v377 = vadd.f32 %v341, %v359
    %v378 = vadd.f32 %v356, %v360
    %v395 = vrot.slane %v364, 7
    %v396 = vrot.slane %v366, 7
    %v397 = vrot.slane %v368, 7
    %v398 = vrot.slane %v370, 7
    %v399 = vrot.slane %v372, 7
    %v400 = vrot.slane %v374, 7
    %v401 = vrot.slane %v376, 7
    %v402 = vrot.slane %v378, 7
    %vm403 = vcmask 1040384
    %v404 = vsel %vm403, %v363, %v395
    %v405 = vsel %vm403, %v365, %v396
    %v406 = vsel %vm403, %v367, %v397
    %v407 = vsel %vm403, %v369, %v398
    %v408 = vsel %vm403, %v371, %v399
    %v409 = vsel %vm403, %v373, %v400
    %v410 = vsel %vm403, %v375, %v401
    %v411 = vsel %vm403, %v377, %v402
    %v420 = vlaneseq
    %vm421 = vcmp.ge.s32.totalorder %v420, 0
    %vm422 = vcmp.lt.s32.totalorder %v420, 256
    %vm423 = vmand %vm421, %vm422
    %424 = vst.msk [vmem:[#allocation5] ss:$4 sm:$0x3] %vm423, %v404
    %s425 = scalar_lea.vmem [#allocation5], 8
    %426 = vst.msk [vmem:[%s425] ss:$4 sm:$0x3] %vm423, %v405
    %s427 = scalar_lea.vmem [#allocation5], 16
    %428 = vst.msk [vmem:[%s427] ss:$4 sm:$0x3] %vm423, %v406
    %s429 = scalar_lea.vmem [#allocation5], 24
    %430 = vst.msk [vmem:[%s429] ss:$4 sm:$0x3] %vm423, %v407
    %s431 = scalar_lea.vmem [#allocation5], 32
    %432 = vst.msk [vmem:[%s431] ss:$4 sm:$0x3] %vm423, %v408
    %s433 = scalar_lea.vmem [#allocation5], 40
    %434 = vst.msk [vmem:[%s433] ss:$4 sm:$0x3] %vm423, %v409
    %s435 = scalar_lea.vmem [#allocation5], 48
    %436 = vst.msk [vmem:[%s435] ss:$4 sm:$0x3] %vm423, %v410
    %s437 = scalar_lea.vmem [#allocation5], 56
    %438 = vst.msk [vmem:[%s437] ss:$4 sm:$0x3] %vm423, %v411
    %v439 = vld [vmem:[%s1] sm:$0x3]
    %v441 = vperm.slane %v439, 0
    %v442 = vperm.slane %v439, 1
    %v445 = vadd.f32 %v131, %v441
    %v446 = vadd.f32 %v146, %v442
    %v447 = vadd.f32 %v161, %v441
    %v448 = vadd.f32 %v176, %v442
    %v449 = vadd.f32 %v191, %v441
    %v450 = vadd.f32 %v206, %v442
    %v451 = vadd.f32 %v221, %v441
    %v452 = vadd.f32 %v236, %v442
    %v453 = vadd.f32 %v251, %v441
    %v454 = vadd.f32 %v266, %v442
    %v455 = vadd.f32 %v281, %v441
    %v456 = vadd.f32 %v296, %v442
    %v457 = vadd.f32 %v311, %v441
    %v458 = vadd.f32 %v326, %v442
    %v459 = vadd.f32 %v341, %v441
    %v460 = vadd.f32 %v356, %v442
    %477 = vst [vmem:[#allocation1] sm:$0xff] %v445
    %478 = vst [vmem:[#allocation1 + $0x9] sm:$0xff] %v446
    %s479 = scalar_lea.vmem [#allocation1], 1
    %v480 = vld [vmem:[%s479] ss:$9 sm:$0xff]
    %481 = vst [vmem:[#allocation1] sm:$0xff] %v447
    %482 = vst [vmem:[#allocation1 + $0x9] sm:$0xff] %v448
    %v483 = vld [vmem:[%s479] ss:$9 sm:$0xff]
    %484 = vst [vmem:[#allocation1] sm:$0xff] %v449
    %485 = vst [vmem:[#allocation1 + $0x9] sm:$0xff] %v450
    %v486 = vld [vmem:[%s479] ss:$9 sm:$0xff]
    %487 = vst [vmem:[#allocation1] sm:$0xff] %v451
    %488 = vst [vmem:[#allocation1 + $0x9] sm:$0xff] %v452
    %v489 = vld [vmem:[%s479] ss:$9 sm:$0xff]
    %490 = vst [vmem:[#allocation1] sm:$0xff] %v453
    %491 = vst [vmem:[#allocation1 + $0x9] sm:$0xff] %v454
    %v492 = vld [vmem:[%s479] ss:$9 sm:$0xff]
    %493 = vst [vmem:[#allocation1] sm:$0xff] %v455
    %494 = vst [vmem:[#allocation1 + $0x9] sm:$0xff] %v456
    %v495 = vld [vmem:[%s479] ss:$9 sm:$0xff]
    %496 = vst [vmem:[#allocation1] sm:$0xff] %v457
    %497 = vst [vmem:[#allocation1 + $0x9] sm:$0xff] %v458
    %v498 = vld [vmem:[%s479] ss:$9 sm:$0xff]
    %499 = vst [vmem:[#allocation1] sm:$0xff] %v459
    %500 = vst [vmem:[#allocation1 + $0x9] sm:$0xff] %v460
    %v501 = vld [vmem:[%s479] ss:$9 sm:$0xff]
    %s510 = scalar_lea.vmem [#allocation5], 1
    %511 = vst.msk [vmem:[%s510] ss:$4 sm:$0x3] %vm423, %v480
    %s512 = scalar_lea.vmem [#allocation5], 9
    %513 = vst.msk [vmem:[%s512] ss:$4 sm:$0x3] %vm423, %v483
    %s514 = scalar_lea.vmem [#allocation5], 17
    %515 = vst.msk [vmem:[%s514] ss:$4 sm:$0x3] %vm423, %v486
    %s516 = scalar_lea.vmem [#allocation5], 25
    %517 = vst.msk [vmem:[%s516] ss:$4 sm:$0x3] %vm423, %v489
    %s518 = scalar_lea.vmem [#allocation5], 33
    %519 = vst.msk [vmem:[%s518] ss:$4 sm:$0x3] %vm423, %v492
    %s520 = scalar_lea.vmem [#allocation5], 41
    %521 = vst.msk [vmem:[%s520] ss:$4 sm:$0x3] %vm423, %v495
    %s522 = scalar_lea.vmem [#allocation5], 49
    %523 = vst.msk [vmem:[%s522] ss:$4 sm:$0x3] %vm423, %v498
    %s524 = scalar_lea.vmem [#allocation5], 57
    %525 = vst.msk [vmem:[%s524] ss:$4 sm:$0x3] %vm423, %v501
    %v526 = vmul.f32 %v37, 1.442695
    %v527 = vpow.pop %v526
    %v528 = vmul.f32 %v38, 1.442695
    %v529 = vpow.pop %v528
    %v530 = vmul.f32 %v39, 1.442695
    %v531 = vpow.pop %v530
    %v532 = vmul.f32 %v40, 1.442695
    %v533 = vpow.pop %v532
    %v534 = vmul.f32 %v41, 1.442695
    %v535 = vpow.pop %v534
    %v536 = vmul.f32 %v42, 1.442695
    %v537 = vpow.pop %v536
    %v538 = vmul.f32 %v43, 1.442695
    %v539 = vpow.pop %v538
    %v540 = vmul.f32 %v44, 1.442695
    %v541 = vpow.pop %v540
    %v542 = vmul.f32 %v45, 1.442695
    %v543 = vpow.pop %v542
    %v544 = vmul.f32 %v46, 1.442695
    %v545 = vpow.pop %v544
    %v546 = vmul.f32 %v47, 1.442695
    %v547 = vpow.pop %v546
    %v548 = vmul.f32 %v48, 1.442695
    %v549 = vpow.pop %v548
    %v550 = vmul.f32 %v49, 1.442695
    %v551 = vpow.pop %v550
    %v552 = vmul.f32 %v50, 1.442695
    %v553 = vpow.pop %v552
    %v554 = vmul.f32 %v51, 1.442695
    %v555 = vpow.pop %v554
    %v556 = vmul.f32 %v52, 1.442695
    %v557 = vpow.pop %v556
    %v558 = vld [vmem:[%s2] sm:$0x1]
    %v559 = vld [vmem:[%s2 + $0x1] sm:$0x1]
    %v560 = vld [vmem:[%s2 + $0x2] sm:$0x1]
    %v561 = vld [vmem:[%s2 + $0x3] sm:$0x1]
    %v562 = vld [vmem:[%s2 + $0x4] sm:$0x1]
    %v563 = vld [vmem:[%s2 + $0x5] sm:$0x1]
    %v564 = vld [vmem:[%s2 + $0x6] sm:$0x1]
    %v565 = vld [vmem:[%s2 + $0x7] sm:$0x1]
    %567 = vset.pattern.permute.xlu0 0
    %568 = vperm.xlu0 %567, %v558
    %v569 = vpop.permute.xlu0 %568
    %v571 = vperm.slane %v569, 0
    %573 = vset.pattern.permute.xlu0 0
    %574 = vperm.xlu0 %573, %v559
    %v575 = vpop.permute.xlu0 %574
    %v577 = vperm.slane %v575, 0
    %579 = vset.pattern.permute.xlu0 0
    %580 = vperm.xlu0 %579, %v560
    %v581 = vpop.permute.xlu0 %580
    %v583 = vperm.slane %v581, 0
    %585 = vset.pattern.permute.xlu0 0
    %586 = vperm.xlu0 %585, %v561
    %v587 = vpop.permute.xlu0 %586
    %v589 = vperm.slane %v587, 0
    %591 = vset.pattern.permute.xlu0 0
    %592 = vperm.xlu0 %591, %v562
    %v593 = vpop.permute.xlu0 %592
    %v595 = vperm.slane %v593, 0
    %597 = vset.pattern.permute.xlu0 0
    %598 = vperm.xlu0 %597, %v563
    %v599 = vpop.permute.xlu0 %598
    %v601 = vperm.slane %v599, 0
    %603 = vset.pattern.permute.xlu0 0
    %604 = vperm.xlu0 %603, %v564
    %v605 = vpop.permute.xlu0 %604
    %v607 = vperm.slane %v605, 0
    %609 = vset.pattern.permute.xlu0 0
    %610 = vperm.xlu0 %609, %v565
    %v611 = vpop.permute.xlu0 %610
    %v613 = vperm.slane %v611, 0
    %v614 = vmul.f32 %v527, %v571
    %v615 = vmul.f32 %v529, %v571
    %v616 = vmul.f32 %v531, %v577
    %v617 = vmul.f32 %v533, %v577
    %v618 = vmul.f32 %v535, %v583
    %v619 = vmul.f32 %v537, %v583
    %v620 = vmul.f32 %v539, %v589
    %v621 = vmul.f32 %v541, %v589
    %v622 = vmul.f32 %v543, %v595
    %v623 = vmul.f32 %v545, %v595
    %v624 = vmul.f32 %v547, %v601
    %v625 = vmul.f32 %v549, %v601
    %v626 = vmul.f32 %v551, %v607
    %v627 = vmul.f32 %v553, %v607
    %v628 = vmul.f32 %v555, %v613
    %v629 = vmul.f32 %v557, %v613
    %646 = vst [vmem:[#allocation1] sm:$0xff] %v614
    %647 = vst [vmem:[#allocation1 + $0x9] sm:$0xff] %v615
    %s648 = scalar_lea.vmem [#allocation1], 2
    %v649 = vld [vmem:[%s648] ss:$9 sm:$0xff]
    %650 = vst [vmem:[#allocation1] sm:$0xff] %v616
    %651 = vst [vmem:[#allocation1 + $0x9] sm:$0xff] %v617
    %v652 = vld [vmem:[%s648] ss:$9 sm:$0xff]
    %653 = vst [vmem:[#allocation1] sm:$0xff] %v618
    %654 = vst [vmem:[#allocation1 + $0x9] sm:$0xff] %v619
    %v655 = vld [vmem:[%s648] ss:$9 sm:$0xff]
    %656 = vst [vmem:[#allocation1] sm:$0xff] %v620
    %657 = vst [vmem:[#allocation1 + $0x9] sm:$0xff] %v621
    %v658 = vld [vmem:[%s648] ss:$9 sm:$0xff]
    %659 = vst [vmem:[#allocation1] sm:$0xff] %v622
    %660 = vst [vmem:[#allocation1 + $0x9] sm:$0xff] %v623
    %v661 = vld [vmem:[%s648] ss:$9 sm:$0xff]
    %662 = vst [vmem:[#allocation1] sm:$0xff] %v624
    %663 = vst [vmem:[#allocation1 + $0x9] sm:$0xff] %v625
    %v664 = vld [vmem:[%s648] ss:$9 sm:$0xff]
    %665 = vst [vmem:[#allocation1] sm:$0xff] %v626
    %666 = vst [vmem:[#allocation1 + $0x9] sm:$0xff] %v627
    %v667 = vld [vmem:[%s648] ss:$9 sm:$0xff]
    %668 = vst [vmem:[#allocation1] sm:$0xff] %v628
    %669 = vst [vmem:[#allocation1 + $0x9] sm:$0xff] %v629
    %v670 = vld [vmem:[%s648] ss:$9 sm:$0xff]
    %s679 = scalar_lea.vmem [#allocation5], 2
    %680 = vst.msk [vmem:[%s679] ss:$4 sm:$0x3] %vm423, %v649
    %s681 = scalar_lea.vmem [#allocation5], 10
    %682 = vst.msk [vmem:[%s681] ss:$4 sm:$0x3] %vm423, %v652
    %s683 = scalar_lea.vmem [#allocation5], 18
    %684 = vst.msk [vmem:[%s683] ss:$4 sm:$0x3] %vm423, %v655
    %s685 = scalar_lea.vmem [#allocation5], 26
    %686 = vst.msk [vmem:[%s685] ss:$4 sm:$0x3] %vm423, %v658
    %s687 = scalar_lea.vmem [#allocation5], 34
    %688 = vst.msk [vmem:[%s687] ss:$4 sm:$0x3] %vm423, %v661
    %s689 = scalar_lea.vmem [#allocation5], 42
    %690 = vst.msk [vmem:[%s689] ss:$4 sm:$0x3] %vm423, %v664
    %s691 = scalar_lea.vmem [#allocation5], 50
    %692 = vst.msk [vmem:[%s691] ss:$4 sm:$0x3] %vm423, %v667
    %s693 = scalar_lea.vmem [#allocation5], 58
    %694 = vst.msk [vmem:[%s693] ss:$4 sm:$0x3] %vm423, %v670
    %v695 = vld [vmem:[%s3] sm:$0x1]
    %v696 = vld [vmem:[%s3 + $0x1] sm:$0x1]
    %v697 = vld [vmem:[%s3 + $0x2] sm:$0x1]
    %v698 = vld [vmem:[%s3 + $0x3] sm:$0x1]
    %v699 = vld [vmem:[%s3 + $0x4] sm:$0x1]
    %v700 = vld [vmem:[%s3 + $0x5] sm:$0x1]
    %v701 = vld [vmem:[%s3 + $0x6] sm:$0x1]
    %v702 = vld [vmem:[%s3 + $0x7] sm:$0x1]
    %704 = vset.pattern.permute.xlu0 0
    %705 = vperm.xlu0 %704, %v695
    %v706 = vpop.permute.xlu0 %705
    %v708 = vperm.slane %v706, 0
    %710 = vset.pattern.permute.xlu0 0
    %711 = vperm.xlu0 %710, %v696
    %v712 = vpop.permute.xlu0 %711
    %v714 = vperm.slane %v712, 0
    %716 = vset.pattern.permute.xlu0 0
    %717 = vperm.xlu0 %716, %v697
    %v718 = vpop.permute.xlu0 %717
    %v720 = vperm.slane %v718, 0
    %722 = vset.pattern.permute.xlu0 0
    %723 = vperm.xlu0 %722, %v698
    %v724 = vpop.permute.xlu0 %723
    %v726 = vperm.slane %v724, 0
    %728 = vset.pattern.permute.xlu0 0
    %729 = vperm.xlu0 %728, %v699
    %v730 = vpop.permute.xlu0 %729
    %v732 = vperm.slane %v730, 0
    %734 = vset.pattern.permute.xlu0 0
    %735 = vperm.xlu0 %734, %v700
    %v736 = vpop.permute.xlu0 %735
    %v738 = vperm.slane %v736, 0
    %740 = vset.pattern.permute.xlu0 0
    %741 = vperm.xlu0 %740, %v701
    %v742 = vpop.permute.xlu0 %741
    %v744 = vperm.slane %v742, 0
    %746 = vset.pattern.permute.xlu0 0
    %747 = vperm.xlu0 %746, %v702
    %v748 = vpop.permute.xlu0 %747
    %v750 = vperm.slane %v748, 0
    %v751 = vmul.f32 %v527, %v708
    %v752 = vmul.f32 %v529, %v708
    %v753 = vmul.f32 %v531, %v714
    %v754 = vmul.f32 %v533, %v714
    %v755 = vmul.f32 %v535, %v720
    %v756 = vmul.f32 %v537, %v720
    %v757 = vmul.f32 %v539, %v726
    %v758 = vmul.f32 %v541, %v726
    %v759 = vmul.f32 %v543, %v732
    %v760 = vmul.f32 %v545, %v732
    %v761 = vmul.f32 %v547, %v738
    %v762 = vmul.f32 %v549, %v738
    %v763 = vmul.f32 %v551, %v744
    %v764 = vmul.f32 %v553, %v744
    %v765 = vmul.f32 %v555, %v750
    %v766 = vmul.f32 %v557, %v750
    %783 = vst [vmem:[#allocation1] sm:$0xff] %v751
    %784 = vst [vmem:[#allocation1 + $0x9] sm:$0xff] %v752
    %s785 = scalar_lea.vmem [#allocation1], 3
    %v786 = vld [vmem:[%s785] ss:$9 sm:$0xff]
    %787 = vst [vmem:[#allocation1] sm:$0xff] %v753
    %788 = vst [vmem:[#allocation1 + $0x9] sm:$0xff] %v754
    %v789 = vld [vmem:[%s785] ss:$9 sm:$0xff]
    %790 = vst [vmem:[#allocation1] sm:$0xff] %v755
    %791 = vst [vmem:[#allocation1 + $0x9] sm:$0xff] %v756
    %v792 = vld [vmem:[%s785] ss:$9 sm:$0xff]
    %793 = vst [vmem:[#allocation1] sm:$0xff] %v757
    %794 = vst [vmem:[#allocation1 + $0x9] sm:$0xff] %v758
    %v795 = vld [vmem:[%s785] ss:$9 sm:$0xff]
    %796 = vst [vmem:[#allocation1] sm:$0xff] %v759
    %797 = vst [vmem:[#allocation1 + $0x9] sm:$0xff] %v760
    %v798 = vld [vmem:[%s785] ss:$9 sm:$0xff]
    %799 = vst [vmem:[#allocation1] sm:$0xff] %v761
    %800 = vst [vmem:[#allocation1 + $0x9] sm:$0xff] %v762
    %v801 = vld [vmem:[%s785] ss:$9 sm:$0xff]
    %802 = vst [vmem:[#allocation1] sm:$0xff] %v763
    %803 = vst [vmem:[#allocation1 + $0x9] sm:$0xff] %v764
    %v804 = vld [vmem:[%s785] ss:$9 sm:$0xff]
    %805 = vst [vmem:[#allocation1] sm:$0xff] %v765
    %806 = vst [vmem:[#allocation1 + $0x9] sm:$0xff] %v766
    %v807 = vld [vmem:[%s785] ss:$9 sm:$0xff]
    %s816 = scalar_lea.vmem [#allocation5], 3
    %817 = vst.msk [vmem:[%s816] ss:$4 sm:$0x3] %vm423, %v786
    %s818 = scalar_lea.vmem [#allocation5], 11
    %819 = vst.msk [vmem:[%s818] ss:$4 sm:$0x3] %vm423, %v789
    %s820 = scalar_lea.vmem [#allocation5], 19
    %821 = vst.msk [vmem:[%s820] ss:$4 sm:$0x3] %vm423, %v792
    %s822 = scalar_lea.vmem [#allocation5], 27
    %823 = vst.msk [vmem:[%s822] ss:$4 sm:$0x3] %vm423, %v795
    %s824 = scalar_lea.vmem [#allocation5], 35
    %825 = vst.msk [vmem:[%s824] ss:$4 sm:$0x3] %vm423, %v798
    %s826 = scalar_lea.vmem [#allocation5], 43
    %827 = vst.msk [vmem:[%s826] ss:$4 sm:$0x3] %vm423, %v801
    %s828 = scalar_lea.vmem [#allocation5], 51
    %829 = vst.msk [vmem:[%s828] ss:$4 sm:$0x3] %vm423, %v804
    %s830 = scalar_lea.vmem [#allocation5], 59
    %831 = vst.msk [vmem:[%s830] ss:$4 sm:$0x3] %vm423, %v807
    // Predicated region
    $region26: #{tpu_custom_call.1} parent=1 // pred_check
      _
    $region27: #{tpu_custom_call.1} parent=1 // pred_check_branch
      %833 = sbr.rel (0) target = $region29
    $region28: #{tpu_custom_call.1} parent=1 // pred_region
      %835 = vsyncadd [#allocation4], 0
      %s836 = sshll.u32 [#allocation5], 4
      %s837 = int_to_ptr.vmem [resolvable:$true] %s836
      %s838 = sshll.u32 %s5, 4
      %s839 = int_to_ptr.hbm [resolvable:$true] %s838
      %844 = dma.vmem_to_hbm [thread:$0]  %s837, 1024, %s839, [#allocation4], 128, 128, 8
    $region29: #{tpu_custom_call.1} parent=1 // pred_fallthru
      _
    // Predicated region
    $region30: #{tpu_custom_call.1} parent=1 // pred_check
      _
    $region31: #{tpu_custom_call.1} parent=1 // pred_check_branch
      %846 = sbr.rel (0) target = $region33
    $region32: #{tpu_custom_call.1} parent=1 // pred_region
      %848 = dma.done [#allocation4], 1024
    $region33: #{tpu_custom_call.1} parent=1 // pred_fallthru
      _
    %849 = vsyncpa [#allocation3], 1
    %850 = vsyncpa [#allocation4], 1

</llo_original>
